<compile_context>
chip_gen: v7x
topology: tpu7x:2x2x1
jax: 0.10.0
libtpu: 0.0.40
codegen_flags: <defaults>
</compile_context>

<pallas_src>
import functools

import jax
import jax.numpy as jnp
from jax.experimental import pallas as pl
from jax.experimental.pallas import tpu as pltpu


def _round_up(n, m):
    return ((n + m - 1) // m) * m


def _maybe_pad2d(a, rows, cols):
    pr, pc = rows - a.shape[0], cols - a.shape[1]
    if pr or pc:
        a = jnp.pad(a, ((0, pr), (0, pc)))
    return a


def mlp_kernel(x_ref, w1_ref, b1_ref, w2_ref, b2_ref, o_ref, *scratch,
               n_k, approximate, compute_dtype):
    xv = x_ref[...]
    if xv.dtype != compute_dtype:
        xv = xv.astype(compute_dtype)        # one in-kernel cast, no extra HBM pass

    # fc1 tile: (tm, Dp) @ (Dp, th) -> f32 accumulation on the MXU.
    h = jnp.dot(xv, w1_ref[...], preferred_element_type=jnp.float32)
    h = h + b1_ref[...]                      # bias add in f32
    if approximate:
        h = jax.nn.gelu(h, approximate=True)     # tanh/exp -> EUP slot
    else:
        # exact GELU (PyTorch nn.GELU default): 0.5*x*(1+erf(x/sqrt(2)))
        h = 0.5 * h * (1.0 + jax.lax.erf(h * jnp.float32(0.7071067811865476)))
    # drop1 (p=0) and norm (Identity) are no-ops.

    # fc2 partial: (tm, th) @ (th, Op) -> f32 accumulate.
    part = jnp.dot(h.astype(w2_ref.dtype), w2_ref[...],
                   preferred_element_type=jnp.float32)

    if n_k == 1:
        o_ref[...] = (part + b2_ref[...]).astype(o_ref.dtype)
    else:
        acc_ref, = scratch
        k = pl.program_id(1)

        @pl.when(k == 0)
        def _():
            acc_ref[...] = part

        @pl.when(k > 0)
        def _():
            acc_ref[...] += part

        @pl.when(k == n_k - 1)
        def _():
            o_ref[...] = (acc_ref[...] + b2_ref[...]).astype(o_ref.dtype)
    # drop2 (p=0) is a no-op.


def mlp_pallas(x, w1, b1, w2, b2, *, tm=512, hidden_tile=2048,
               compute_dtype=jnp.bfloat16, approximate_gelu=None,
               out_dtype=None, lane_align=128):
    """ViT Mlp forward: fc2(GELU(fc1(x))) with drop=0.0, norm=Identity.

    x: (B, S, D_in); w1: (D_in, H); b1: (H,); w2: (H, D_out); b2: (D_out,).

    tm: token (row) tile; 512 amortizes grid overhead on v5e/v6e, auto-adjusted
        so the M grid has >= 2 steps (v7x 2-TC sharding) and no wasted padding.
    hidden_tile: max hidden tile; larger H is streamed over a grid axis with an
        f32 accumulator (bounds VMEM for large MLPs, esp. on v7x's 64 MiB).
    compute_dtype: MXU input dtype.  bf16 recommended everywhere (on v5e f32
        matmul is emulated); accumulation is always f32.
    approximate_gelu: None -> tanh-approx GELU iff compute_dtype != float32.
    """
    B, S, D_in = x.shape
    H = w1.shape[1]
    D_out = w2.shape[1]
    M = B * S
    out_dtype = out_dtype or x.dtype
    cdt = jnp.dtype(compute_dtype or x.dtype)
    if approximate_gelu is None:
        approximate_gelu = cdt != jnp.dtype(jnp.float32)

    # Feature dims padded to lane-dense multiples (zero padding is exact:
    # GELU(0)=0 and padded w2 rows are zero; padded out columns are sliced off).
    Dp = _round_up(D_in, lane_align)
    Op = _round_up(D_out, lane_align)
    Hp = _round_up(H, lane_align)
    th = min(_round_up(hidden_tile, lane_align), Hp)
    Hp = _round_up(Hp, th)
    n_k = Hp // th

    # Row tiling: multiple of 8 sublanes, >= 2 grid steps when possible (v7x
    # megacore), rebalanced to minimize padded rows.
    tm = max(8, _round_up(min(tm, M), 8))
    while tm > 8 and pl.cdiv(M, tm) < 2:
        tm = _round_up(tm // 2, 8)
    n_m = pl.cdiv(M, tm)
    tm = _round_up(pl.cdiv(M, n_m), 8)
    Mp = _round_up(M, tm)
    n_m = Mp // tm

    # Operand prep: pads / casts are skipped when already aligned; x keeps its
    # dtype (cast happens in-kernel).
    x2 = _maybe_pad2d(x.reshape(M, D_in), Mp, Dp)
    w1p = _maybe_pad2d(w1.astype(cdt), Dp, Hp)
    w2p = _maybe_pad2d(w2.astype(cdt), Hp, Op)
    b1p = _maybe_pad2d(b1.astype(jnp.float32).reshape(1, H), 1, Hp)
    b2p = _maybe_pad2d(b2.astype(jnp.float32).reshape(1, D_out), 1, Op)

    def spec(shape, index_map, single_buffer=False):
        if single_buffer:
            return pl.BlockSpec(shape, index_map, pipeline_mode=pl.Buffered(1))
        return pl.BlockSpec(shape, index_map)

    weights_resident = n_k == 1   # constant block index across the whole grid
    in_specs = [
        spec((tm, Dp), lambda i, k: (i, 0)),                     # x (streamed)
        spec((Dp, th), lambda i, k: (0, k), weights_resident),   # w1
        spec((1, th), lambda i, k: (0, k), weights_resident),    # b1 (f32)
        spec((th, Op), lambda i, k: (k, 0), weights_resident),   # w2
        spec((1, Op), lambda i, k: (0, 0), True),                # b2 (f32, const)
    ]
    out_spec = pl.BlockSpec((tm, Op), lambda i, k: (i, 0))
    scratch = [pltpu.VMEM((tm, Op), jnp.float32)] if n_k > 1 else []

    # VMEM budget: actual tile footprint + headroom, capped below physical VMEM
    # (important on v7x where per-TC VMEM is only 64 MiB).
    csz = cdt.itemsize
    osz = jnp.dtype(out_dtype).itemsize
    xsz = x.dtype.itemsize
    w_bufs = 1 if weights_resident else 2
    need = (2 * tm * Dp * xsz                        # x tiles (double-buffered)
            + w_bufs * (Dp * th + th * Op) * csz     # w1 / w2 tiles
            + w_bufs * 8 * th * 4 + 8 * Op * 4       # b1 / b2 (sublane-padded)
            + 2 * tm * Op * osz                      # out tiles
            + (tm * Op * 4 if n_k > 1 else 0)        # f32 accumulator scratch
            + 3 * tm * th * 4)                       # h intermediate + GELU temps
    try:
        phys = int(pltpu.get_tpu_info().vmem_capacity_bytes)
    except Exception:
        phys = 64 * 1024 * 1024                      # v7x per-TC (most restrictive)
    vmem_limit = min(max(int(need * 1.25) + (8 << 20), 16 << 20), phys * 7 // 8)

    kernel = functools.partial(mlp_kernel, n_k=n_k,
                               approximate=approximate_gelu, compute_dtype=cdt)

    out2 = pl.pallas_call(
        kernel,
        out_shape=jax.ShapeDtypeStruct((Mp, Op), out_dtype),
        grid_spec=pltpu.PrefetchScalarGridSpec(
            num_scalar_prefetch=0,
            grid=(n_m, n_k),                         # reduction (hidden) axis last
            in_specs=in_specs,
            out_specs=out_spec,
            scratch_shapes=tuple(scratch),
        ),
        compiler_params=pltpu.CompilerParams(
            dimension_semantics=("parallel", "arbitrary"),
            vmem_limit_bytes=int(vmem_limit),
        ),
    )(x2, w1p, b1p, w2p, b2p)

    if Mp != M or Op != D_out:
        out2 = out2[:M, :D_out]
    return out2.reshape(B, S, D_out)


def mlp_ref(x, w1, b1, w2, b2):
    h = jnp.einsum("bsd,dh->bsh", x, w1) + b1
    h = 0.5 * h * (1.0 + jax.lax.erf(h / jnp.sqrt(2.0)))
    return jnp.einsum("bsh,ho->bso", h, w2) + b2


if __name__ == "__main__":
    # Module config (synthetic, deterministic init):
    #   in_features=32, hidden_features=64, out_features=32, bias=True, drop=0.0
    B, S = 2, 8
    D_in, H, D_out = 32, 64, 32

    key = jax.random.PRNGKey(0)
    kx, k1, k2, k3, k4, k5, k6 = jax.random.split(key, 7)

    x = jax.random.normal(kx, (B, S, D_in), dtype=jnp.float32)
    # Linear weights stored (in, out) so the kernel does x @ W (PyTorch stores
    # (out, in) and computes x @ W.T — same math).
    w1 = jax.random.normal(k1, (D_in, H), dtype=jnp.float32) * 0.02
    b1 = jax.random.normal(k2, (H,), dtype=jnp.float32) * 0.02
    w2 = jax.random.normal(k3, (H, D_out), dtype=jnp.float32) * 0.02
    b2 = jax.random.normal(k4, (D_out,), dtype=jnp.float32) * 0.02

    ref = mlp_ref(x, w1, b1, w2, b2)

    # 1) f32 compute path, exact erf GELU: bit-tight vs PyTorch-equivalent ref.
    out_f32 = mlp_pallas(x, w1, b1, w2, b2, compute_dtype=jnp.float32)
    out_f32 = jax.block_until_ready(out_f32)
    assert out_f32.shape == (B, S, D_out)
    assert jnp.allclose(out_f32, ref, atol=1e-5, rtol=1e-5)

    # 2) Production path: bf16 MXU inputs, f32 accumulation, tanh-approx GELU.
    out_bf16 = mlp_pallas(x, w1, b1, w2, b2)
    out_bf16 = jax.block_until_ready(out_bf16)
    assert out_bf16.shape == (B, S, D_out)
    assert jnp.allclose(out_bf16, ref, atol=2e-2, rtol=2e-2)

    # 3) Exercise the hidden-dim tiling / f32 accumulator path (n_k > 1).
    H2 = 256
    w1b = jax.random.normal(k5, (D_in, H2), dtype=jnp.float32) * 0.02
    b1b = jnp.zeros((H2,), dtype=jnp.float32)
    w2b = jax.random.normal(k6, (H2, D_out), dtype=jnp.float32) * 0.02
    ref2 = mlp_ref(x, w1b, b1b, w2b, b2)
    out_k = mlp_pallas(x, w1b, b1b, w2b, b2,
                       compute_dtype=jnp.float32, hidden_tile=128)
    out_k = jax.block_until_ready(out_k)
    assert out_k.shape == (B, S, D_out)
    assert jnp.allclose(out_k, ref2, atol=1e-5, rtol=1e-5)

    print("KERNEL_OK")
</pallas_src>

<mosaic_0001>
module attributes {stable_mosaic.version = 11 : i64} {
  func.func @mlp_kernel(%arg0: i32, %arg1: i32, %arg2: memref<8x128xf32, #tpu.memory_space<vmem>>, %arg3: memref<128x128xf32, #tpu.memory_space<vmem>>, %arg4: memref<1x128xf32, #tpu.memory_space<vmem>>, %arg5: memref<128x128xf32, #tpu.memory_space<vmem>>, %arg6: memref<1x128xf32, #tpu.memory_space<vmem>>, %arg7: memref<8x128xf32, #tpu.memory_space<vmem>>) attributes {dimension_semantics = [#tpu.dimension_semantics<parallel>, #tpu.dimension_semantics<arbitrary>], iteration_bounds = array<i64: 2, 1>, scalar_prefetch = 0 : i64, scratch_operands = 0 : i64, tpu.core_type = #tpu.core_type<tc>, window_params = [{transform_indices = @transform_0, window_bounds = array<i64: 8, 128>}, {pipeline_mode = #tpu.pipeline_mode<synchronous>, transform_indices = @transform_1, window_bounds = array<i64: 128, 128>}, {pipeline_mode = #tpu.pipeline_mode<synchronous>, transform_indices = @transform_2, window_bounds = array<i64: 1, 128>}, {pipeline_mode = #tpu.pipeline_mode<synchronous>, transform_indices = @transform_3, window_bounds = array<i64: 128, 128>}, {pipeline_mode = #tpu.pipeline_mode<synchronous>, transform_indices = @transform_4, window_bounds = array<i64: 1, 128>}, {transform_indices = @transform_5, window_bounds = array<i64: 8, 128>}]} {
    %c0 = arith.constant 0 : index
    %c0_0 = arith.constant 0 : index
    %0 = vector.load %arg2[%c0, %c0_0] : memref<8x128xf32, #tpu.memory_space<vmem>>, vector<8x128xf32>
    %c0_1 = arith.constant 0 : index
    %c0_2 = arith.constant 0 : index
    %1 = vector.load %arg3[%c0_1, %c0_2] : memref<128x128xf32, #tpu.memory_space<vmem>>, vector<128x128xf32>
    %cst = arith.constant dense<0.000000e+00> : vector<8x128xf32>
    %2 = tpu.matmul %0, %1, %cst {dimension_numbers = #tpu.dot_dimension_numbers<[1], [0], [0], [1], [0, 0, 1, 1], [], []>} : vector<8x128xf32>, vector<128x128xf32>, vector<8x128xf32> -> vector<8x128xf32>
    %c0_3 = arith.constant 0 : index
    %c0_4 = arith.constant 0 : index
    %3 = vector.load %arg4[%c0_3, %c0_4] : memref<1x128xf32, #tpu.memory_space<vmem>>, vector<1x128xf32>
    %4 = vector.broadcast %3 : vector<1x128xf32> to vector<8x128xf32>
    %5 = arith.addf %2, %4 : vector<8x128xf32>
    %cst_5 = arith.constant 5.000000e-01 : f32
    %6 = vector.broadcast %cst_5 : f32 to vector<8x128xf32>
    %7 = arith.mulf %6, %5 : vector<8x128xf32>
    %cst_6 = arith.constant 0.707106769 : f32
    %8 = vector.broadcast %cst_6 : f32 to vector<8x128xf32>
    %9 = arith.mulf %5, %8 : vector<8x128xf32>
    %10 = math.erf %9 : vector<8x128xf32>
    %cst_7 = arith.constant 1.000000e+00 : f32
    %11 = vector.broadcast %cst_7 : f32 to vector<8x128xf32>
    %12 = arith.addf %11, %10 : vector<8x128xf32>
    %13 = arith.mulf %7, %12 : vector<8x128xf32>
    %c0_8 = arith.constant 0 : index
    %c0_9 = arith.constant 0 : index
    %14 = vector.load %arg5[%c0_8, %c0_9] : memref<128x128xf32, #tpu.memory_space<vmem>>, vector<128x128xf32>
    %cst_10 = arith.constant dense<0.000000e+00> : vector<8x128xf32>
    %15 = tpu.matmul %13, %14, %cst_10 {dimension_numbers = #tpu.dot_dimension_numbers<[1], [0], [0], [1], [0, 0, 1, 1], [], []>} : vector<8x128xf32>, vector<128x128xf32>, vector<8x128xf32> -> vector<8x128xf32>
    %c0_11 = arith.constant 0 : index
    %c0_12 = arith.constant 0 : index
    %16 = vector.load %arg6[%c0_11, %c0_12] : memref<1x128xf32, #tpu.memory_space<vmem>>, vector<1x128xf32>
    %17 = vector.broadcast %16 : vector<1x128xf32> to vector<8x128xf32>
    %18 = arith.addf %15, %17 : vector<8x128xf32>
    %c0_13 = arith.constant 0 : index
    %c0_14 = arith.constant 0 : index
    %19 = vector.load %arg7[%c0_13, %c0_14] : memref<8x128xf32, #tpu.memory_space<vmem>>, vector<8x128xf32>
    tpu.vector_store %arg7[%c0_13, %c0_14], %18 {strides = array<i32>} : memref<8x128xf32, #tpu.memory_space<vmem>>, vector<8x128xf32>,
    return
  }
  func.func @transform_0(%arg0: i32, %arg1: i32) -> (i32, i32) {
    %c0_i32 = arith.constant 0 : i32
    %c0_i32_0 = arith.constant 0 : i32
    return %arg0, %c0_i32 : i32, i32
  }
  func.func @transform_1(%arg0: i32, %arg1: i32) -> (i32, i32) {
    %c0_i32 = arith.constant 0 : i32
    %c0_i32_0 = arith.constant 0 : i32
    return %c0_i32, %arg1 : i32, i32
  }
  func.func @transform_2(%arg0: i32, %arg1: i32) -> (i32, i32) {
    %c0_i32 = arith.constant 0 : i32
    %c0_i32_0 = arith.constant 0 : i32
    return %c0_i32, %arg1 : i32, i32
  }
  func.func @transform_3(%arg0: i32, %arg1: i32) -> (i32, i32) {
    %c0_i32 = arith.constant 0 : i32
    %c0_i32_0 = arith.constant 0 : i32
    return %arg1, %c0_i32 : i32, i32
  }
  func.func @transform_4(%arg0: i32, %arg1: i32) -> (i32, i32) {
    %c0_i32 = arith.constant 0 : i32
    %c0_i32_0 = arith.constant 0 : i32
    %c0_i32_1 = arith.constant 0 : i32
    return %c0_i32, %c0_i32_0 : i32, i32
  }
  func.func @transform_5(%arg0: i32, %arg1: i32) -> (i32, i32) {
    %c0_i32 = arith.constant 0 : i32
    %c0_i32_0 = arith.constant 0 : i32
    return %arg0, %c0_i32 : i32, i32
  }
}

</mosaic_0001>

<llo_original>
// kernel: tpu_custom_call.1
$region0: #{tpu_custom_call.1}
  #allocation0 [shape = 'u32[]', space=smem, size = 0x4, offset = 0x4, fixed_abs, tag = 'smem constant byte address 0x4 - core index']
  #allocation1 [shape = 'u32[144,128]{1,0:T(1,128)}', space=vmem, size = 0x12000, scoped, tag = 'internal scratch']
  %s0 = inlined_call_operand.hbm [shape: f32[16,128], index: 0, kind: input, shape index: {}]
  %s1 = inlined_call_operand.hbm [shape: f32[128,128], index: 1, kind: input, shape index: {}]
  %s2 = inlined_call_operand.vmem [shape: f32[1,128], index: 2, kind: input, shape index: {}]
  %s3 = inlined_call_operand.hbm [shape: f32[128,128], index: 3, kind: input, shape index: {}]
  %s4 = inlined_call_operand.vmem [shape: f32[1,128], index: 4, kind: input, shape index: {}]
  %s5 = inlined_call_operand.hbm [shape: f32[16,128], index: 5, kind: output, shape index: {}]
  %s6 = sld [smem:[#allocation0]]
  $region65: #{tpu_custom_call.1} parent=0
    _
  %s8 = ssub.s32 1, %s6
  %s9 = scalar_select 0, %s8, %s6
  $region1: #{tpu_custom_call.1} parent=0
    #allocation2 [shape = 'u8[8192]{0}', space=vmem, size = 0x2000, scoped, tag = 'input window, operand 0']
    #allocation3 [shape = 's32[2]{0}', space=sflag, size = 0x8, scoped, tag = 'scoped memory for tpu_custom_call.1']
    #allocation4 [shape = 's32[2]{0}', space=sflag, size = 0x8, scoped, tag = 'scoped memory for tpu_custom_call.1']
    #allocation5 [shape = 'u8[65536]{0}', space=vmem, size = 0x10000, scoped, tag = 'input window, operand 1, single buffered']
    #allocation6 [shape = 's32[1]{0}', space=sflag, size = 0x4, scoped, tag = 'scoped memory for tpu_custom_call.1']
    #allocation7 [shape = 'u8[65536]{0}', space=vmem, size = 0x10000, scoped, tag = 'input window, operand 3, single buffered']
    #allocation8 [shape = 'u8[8192]{0}', space=vmem, size = 0x2000, scoped, tag = 'output window, operand 0']
    %10 = vsyncpa [#allocation3], 0
    %s11 = scalar_lea.sflag [#allocation3], 1
    %12 = vsyncpa %s11, 0
    %13 = vsyncpa [#allocation6], 0
    %14 = vsyncpa [#allocation4], 0
    %s15 = scalar_lea.sflag [#allocation4], 1
    %16 = vsyncpa %s15, 0
    loop: start=0, step=1, limit=4
    $region2: #{tpu_custom_call.1} parent=1 // loop_pre_header
      _
    $region3: #{tpu_custom_call.1} parent=1 // loop_header
      %s18 = sphi 0, %s22
      %p19 = scmp.ge.s32.totalorder %s18, 4
      %s25 = sphi 0, %s37
      %s26 = sphi 0, %s33
      %s27 = sphi 0, %s25
      %s28 = sphi 0, %s26
      %s29 = sphi 0, %s27
      %s30 = sphi 0, %s28
      %s40 = sphi 0, %s42
      %s43 = sphi 0, %s40
      %s44 = sphi 0, %s43
      %s60 = sphi 0, %s44
      %s66 = sphi 0, %s68
      %s69 = sphi 0, %s66
      %s70 = sphi 0, %s69
      %s86 = sphi 0, %s70
      %s92 = sphi 0, %s94
      %s95 = sphi 0, %s92
      %s96 = sphi 0, %s95
      %s112 = sphi 0, %s96
      %s118 = sphi 0, %s120
      %s121 = sphi 0, %s118
      %s122 = sphi 0, %s121
      %s138 = sphi 0, %s122
      %s142 = sphi 0, %s142
      %s144 = sphi 0, %s142
      %s145 = sphi 0, %s144
      %s159 = sphi 0, %s145
      %s165 = sphi 0, %s167
      %s168 = sphi 0, %s165
      %s169 = sphi 0, %s168
      %s185 = sphi 0, %s169
    $region4: #{tpu_custom_call.1} parent=1 // loop_header_branch
      %21 = sbr.rel (%p19) target = $region8
    $region5: #{tpu_custom_call.1} parent=1 // loop_body
      %s23 = ssub.s32 %s18, 1
      %s24 = ssub.s32 %s18, 2
      %s31 = sadd.s32 1, %s26
      %p32 = scmp.ge.s32.totalorder %s31, 1
      %s33 = scalar_select %p32, 0, %s31
      %s34 = sadd.s32 1, %s25
      %s35 = scalar_select %p32, %s34, %s25
      %p36 = scmp.ge.s32.totalorder %s35, 2
      %s37 = scalar_select %p36, 0, %s35
      %s38 = ssub.s32 %s25, %s37
      %p39 = scmp.eq.s32.totalorder %s38, 0
      %s41 = sadd.s32 %s40, 1
      %s42 = scalar_select %p39, %s40, %s41
      %p45 = pneg %p39
      %p46 = scmp.eq.s32.totalorder %s18, 1
      %p47 = por %p45, %p46
      %p48 = scmp.ne.s32.totalorder %s40, %s43
      %p49 = scmp.eq.s32.totalorder %s18, 0
      %p50 = por %p48, %p49
      %p51 = scmp.ne.s32.totalorder %s40, %s43
      %p52 = scmp.eq.s32.totalorder %s23, 1
      %p53 = por %p51, %p52
      %p54 = scmp.ne.s32.totalorder %s43, %s44
      %p55 = scmp.eq.s32.totalorder %s23, 0
      %p56 = por %p54, %p55
      %p57 = scmp.ne.s32.totalorder %s43, %s44
      %p58 = scmp.eq.s32.totalorder %s24, 1
      %p59 = por %p57, %p58
      %p61 = scmp.ne.s32.totalorder %s44, %s60
      %p62 = scmp.eq.s32.totalorder %s24, 0
      %p63 = por %p61, %p62
      %s64 = ssub.s32 %s26, %s33
      %p65 = scmp.eq.s32.totalorder %s64, 0
      %s67 = sadd.s32 %s66, 1
      %s68 = scalar_select %p65, %s66, %s67
      %p71 = pneg %p65
      %p72 = scmp.eq.s32.totalorder %s18, 1
      %p73 = por %p71, %p72
      %p74 = scmp.ne.s32.totalorder %s66, %s69
      %p75 = scmp.eq.s32.totalorder %s18, 0
      %p76 = por %p74, %p75
      %p77 = scmp.ne.s32.totalorder %s66, %s69
      %p78 = scmp.eq.s32.totalorder %s23, 1
      %p79 = por %p77, %p78
      %p80 = scmp.ne.s32.totalorder %s69, %s70
      %p81 = scmp.eq.s32.totalorder %s23, 0
      %p82 = por %p80, %p81
      %p83 = scmp.ne.s32.totalorder %s69, %s70
      %p84 = scmp.eq.s32.totalorder %s24, 1
      %p85 = por %p83, %p84
      %p87 = scmp.ne.s32.totalorder %s70, %s86
      %p88 = scmp.eq.s32.totalorder %s24, 0
      %p89 = por %p87, %p88
      %s90 = ssub.s32 %s26, %s33
      %p91 = scmp.eq.s32.totalorder %s90, 0
      %s93 = sadd.s32 %s92, 1
      %s94 = scalar_select %p91, %s92, %s93
      %p97 = pneg %p91
      %p98 = scmp.eq.s32.totalorder %s18, 1
      %p99 = por %p97, %p98
      %p100 = scmp.ne.s32.totalorder %s92, %s95
      %p101 = scmp.eq.s32.totalorder %s18, 0
      %p102 = por %p100, %p101
      %p103 = scmp.ne.s32.totalorder %s92, %s95
      %p104 = scmp.eq.s32.totalorder %s23, 1
      %p105 = por %p103, %p104
      %p106 = scmp.ne.s32.totalorder %s95, %s96
      %p107 = scmp.eq.s32.totalorder %s23, 0
      %p108 = por %p106, %p107
      %p109 = scmp.ne.s32.totalorder %s95, %s96
      %p110 = scmp.eq.s32.totalorder %s24, 1
      %p111 = por %p109, %p110
      %p113 = scmp.ne.s32.totalorder %s96, %s112
      %p114 = scmp.eq.s32.totalorder %s24, 0
      %p115 = por %p113, %p114
      %s116 = ssub.s32 %s26, %s33
      %p117 = scmp.eq.s32.totalorder %s116, 0
      %s119 = sadd.s32 %s118, 1
      %s120 = scalar_select %p117, %s118, %s119
      %p123 = pneg %p117
      %p124 = scmp.eq.s32.totalorder %s18, 1
      %p125 = por %p123, %p124
      %p126 = scmp.ne.s32.totalorder %s118, %s121
      %p127 = scmp.eq.s32.totalorder %s18, 0
      %p128 = por %p126, %p127
      %p129 = scmp.ne.s32.totalorder %s118, %s121
      %p130 = scmp.eq.s32.totalorder %s23, 1
      %p131 = por %p129, %p130
      %p132 = scmp.ne.s32.totalorder %s121, %s122
      %p133 = scmp.eq.s32.totalorder %s23, 0
      %p134 = por %p132, %p133
      %p135 = scmp.ne.s32.totalorder %s121, %s122
      %p136 = scmp.eq.s32.totalorder %s24, 1
      %p137 = por %p135, %p136
      %p139 = scmp.ne.s32.totalorder %s122, %s138
      %p140 = scmp.eq.s32.totalorder %s24, 0
      %p141 = por %p139, %p140
      %s143 = sadd.s32 %s142, 1
      %p146 = scmp.eq.s32.totalorder %s18, 1
      %p147 = scmp.ne.s32.totalorder %s142, %s144
      %p148 = scmp.eq.s32.totalorder %s18, 0
      %p149 = por %p147, %p148
      %p150 = scmp.ne.s32.totalorder %s142, %s144
      %p151 = scmp.eq.s32.totalorder %s23, 1
      %p152 = por %p150, %p151
      %p153 = scmp.ne.s32.totalorder %s144, %s145
      %p154 = scmp.eq.s32.totalorder %s23, 0
      %p155 = por %p153, %p154
      %p156 = scmp.ne.s32.totalorder %s144, %s145
      %p157 = scmp.eq.s32.totalorder %s24, 1
      %p158 = por %p156, %p157
      %p160 = scmp.ne.s32.totalorder %s145, %s159
      %p161 = scmp.eq.s32.totalorder %s24, 0
      %p162 = por %p160, %p161
      %s163 = ssub.s32 %s25, %s37
      %p164 = scmp.eq.s32.totalorder %s163, 0
      %s166 = sadd.s32 %s165, 1
      %s167 = scalar_select %p164, %s165, %s166
      %p170 = pneg %p164
      %p171 = scmp.eq.s32.totalorder %s18, 1
      %p172 = por %p170, %p171
      %p173 = scmp.ne.s32.totalorder %s165, %s168
      %p174 = scmp.eq.s32.totalorder %s18, 0
      %p175 = por %p173, %p174
      %p176 = scmp.ne.s32.totalorder %s165, %s168
      %p177 = scmp.eq.s32.totalorder %s23, 1
      %p178 = por %p176, %p177
      %p179 = scmp.ne.s32.totalorder %s168, %s169
      %p180 = scmp.eq.s32.totalorder %s23, 0
      %p181 = por %p179, %p180
      %p182 = scmp.ne.s32.totalorder %s168, %s169
      %p183 = scmp.eq.s32.totalorder %s24, 1
      %p184 = por %p182, %p183
      %p186 = scmp.ne.s32.totalorder %s169, %s185
      %p187 = scmp.eq.s32.totalorder %s24, 0
      %p188 = por %p186, %p187
      %p189 = scmp.le.s32.totalorder 1, %s18
      %p190 = scmp.lt.s32.totalorder %s18, 3
      %p191 = pnand %p189, %p190
      %p192 = pneg %p191
      // Predicated region
      $region9: #{tpu_custom_call.1} parent=5 // pred_check
        _
      $region10: #{tpu_custom_call.1} parent=5 // pred_check_branch
        %194 = sbr.rel (%p191) target = $region12
      $region11: #{tpu_custom_call.1} parent=5 // pred_region
        %s195 = ssub.s32 %s18, 1
        // Predicated region
        $region13: #{tpu_custom_call.1} parent=11 // pred_check
          %p196 = pneg %p82
        $region14: #{tpu_custom_call.1} parent=11 // pred_check_branch
          %198 = sbr.rel (%p196) target = $region16
        $region15: #{tpu_custom_call.1} parent=11 // pred_region
          %s200 = ssub.s32 2048, 2048
          %201 = vsyncadd [#allocation6], %s200
          %s202 = smul.addr %s28, 128
          %s203 = scalar_lea.hbm %s1, %s202
          %s204 = sshll.u32 [#allocation5], 4
          %s205 = int_to_ptr.vmem [resolvable:$true] %s204
          %210 = dma.hbm_to_vmem [thread:$0]  %s203, 2048, %s205, [#allocation6], 128, 128, 8
        $region16: #{tpu_custom_call.1} parent=11 // pred_fallthru
          _
        // Predicated region
        $region17: #{tpu_custom_call.1} parent=11 // pred_check
          %p211 = pneg %p108
        $region18: #{tpu_custom_call.1} parent=11 // pred_check_branch
          %213 = sbr.rel (%p211) target = $region20
        $region19: #{tpu_custom_call.1} parent=11 // pred_region
          %p214 = scmp.lt.s32.totalorder %s28, 0
          %s215 = scalar_select %p214, %s28, 0
          %s216 = scalar_lea.vmem %s2, %s215
        $region20: #{tpu_custom_call.1} parent=11 // pred_fallthru
          _
        // Predicated region
        $region21: #{tpu_custom_call.1} parent=11 // pred_check
          %p217 = pneg %p134
        $region22: #{tpu_custom_call.1} parent=11 // pred_check_branch
          %219 = sbr.rel (%p217) target = $region24
        $region23: #{tpu_custom_call.1} parent=11 // pred_region
          %s220 = smul.u32 16, %s28
          %s222 = ssub.s32 2048, 2048
          %223 = vsyncadd [#allocation6], %s222
          %s224 = smul.addr %s220, 128
          %s225 = scalar_lea.hbm %s3, %s224
          %s226 = sshll.u32 [#allocation7], 4
          %s227 = int_to_ptr.vmem [resolvable:$true] %s226
          %232 = dma.hbm_to_vmem [thread:$0]  %s225, 2048, %s227, [#allocation6], 128, 128, 8
        $region24: #{tpu_custom_call.1} parent=11 // pred_fallthru
          _
        // Predicated region
        $region25: #{tpu_custom_call.1} parent=11 // pred_check
          %p233 = pneg %p155
        $region26: #{tpu_custom_call.1} parent=11 // pred_check_branch
          %235 = sbr.rel (%p233) target = $region28
        $region27: #{tpu_custom_call.1} parent=11 // pred_region
          _
        $region28: #{tpu_custom_call.1} parent=11 // pred_fallthru
          _
      $region12: #{tpu_custom_call.1} parent=5 // pred_fallthru
        _
      %p236 = scmp.lt.s32.totalorder %s18, 2
      // Predicated region
      $region29: #{tpu_custom_call.1} parent=5 // pred_check
        %p237 = pneg %p236
      $region30: #{tpu_custom_call.1} parent=5 // pred_check_branch
        %239 = sbr.rel (%p237) target = $region32
      $region31: #{tpu_custom_call.1} parent=5 // pred_region
        // Predicated region
        $region33: #{tpu_custom_call.1} parent=31 // pred_check
          %p240 = pneg %p50
        $region34: #{tpu_custom_call.1} parent=31 // pred_check_branch
          %242 = sbr.rel (%p240) target = $region36
        $region35: #{tpu_custom_call.1} parent=31 // pred_region
          %s243 = sand.u32 %s40, 1
          %s244 = scalar_lea.sflag [#allocation3], %s243
          %s245 = sand.u32 %s40, 1
          %s246 = smul.addr %s245, 8
          %s247 = scalar_lea.vmem [#allocation2], %s246
          %s249 = ssub.s32 128, 128
          %250 = vsyncadd %s244, %s249
          %s251 = smul.addr %s25, 128
          %s252 = scalar_lea.hbm %s0, %s251
          %s254 = sshll.u32 %s247, 4
          %s255 = int_to_ptr.vmem [resolvable:$true] %s254
          %257 = dma.hbm_to_vmem [thread:$0]  %s252, 128, %s255, %s244
        $region36: #{tpu_custom_call.1} parent=31 // pred_fallthru
          _
      $region32: #{tpu_custom_call.1} parent=5 // pred_fallthru
        _
      %p258 = scmp.le.s32.totalorder 1, %s18
      %p259 = scmp.lt.s32.totalorder %s18, 3
      %p260 = pnand %p258, %p259
      %p261 = pneg %p260
      // Predicated region
      $region37: #{tpu_custom_call.1} parent=5 // pred_check
        _
      $region38: #{tpu_custom_call.1} parent=5 // pred_check_branch
        %263 = sbr.rel (%p260) target = $region40
      $region39: #{tpu_custom_call.1} parent=5 // pred_region
        %s264 = ssub.s32 %s18, 1
        %s265 = sand.u32 %s43, 1
        %s266 = scalar_lea.sflag [#allocation3], %s265
        %s267 = sand.u32 %s43, 1
        %s268 = smul.addr %s267, 8
        %s269 = scalar_lea.vmem [#allocation2], %s268
        // Predicated region
        $region41: #{tpu_custom_call.1} parent=39 // pred_check
          %p270 = pneg %p56
        $region42: #{tpu_custom_call.1} parent=39 // pred_check_branch
          %272 = sbr.rel (%p270) target = $region44
        $region43: #{tpu_custom_call.1} parent=39 // pred_region
          %273 = dma.done %s266, 128
        $region44: #{tpu_custom_call.1} parent=39 // pred_fallthru
          _
        // Predicated region
        $region45: #{tpu_custom_call.1} parent=39 // pred_check
          %p274 = pneg %p82
        $region46: #{tpu_custom_call.1} parent=39 // pred_check_branch
          %276 = sbr.rel (%p274) target = $region48
        $region47: #{tpu_custom_call.1} parent=39 // pred_region
          %277 = dma.done [#allocation6], 2048
        $region48: #{tpu_custom_call.1} parent=39 // pred_fallthru
          _
        // Predicated region
        $region49: #{tpu_custom_call.1} parent=39 // pred_check
          %p278 = pneg %p134
        $region50: #{tpu_custom_call.1} parent=39 // pred_check_branch
          %280 = sbr.rel (%p278) target = $region52
        $region51: #{tpu_custom_call.1} parent=39 // pred_region
          %281 = dma.done [#allocation6], 2048
        $region52: #{tpu_custom_call.1} parent=39 // pred_fallthru
          _
        %s282 = sand.u32 %s43, 1
        %s283 = scalar_lea.sflag [#allocation3], %s282
        %s284 = sand.u32 %s43, 1
        %s285 = smul.addr %s284, 8
        %s286 = scalar_lea.vmem [#allocation2], %s285
        %p287 = pneg %p56
        %p288 = pneg %p53
        %p289 = pneg %p82
        %p290 = pneg %p79
        %p291 = scmp.lt.s32.totalorder %s28, 0
        %s292 = scalar_select %p291, %s28, 0
        %s293 = scalar_lea.vmem %s2, %s292
        %p294 = pneg %p108
        %p295 = pneg %p105
        %p296 = pneg %p134
        %p297 = pneg %p131
        %p298 = pneg %p155
        %p299 = pneg %p152
        %p300 = pneg %p181
        %p301 = pneg %p178
        %s302 = sand.u32 %s168, 1
        %s303 = scalar_lea.sflag [#allocation4], %s302
        %s304 = sand.u32 %s168, 1
        %s305 = smul.addr %s304, 8
        %s306 = scalar_lea.vmem [#allocation8], %s305
        %p307 = scmp.lt.s32.totalorder %s28, 0
        %s308 = scalar_select %p307, %s28, 0
        %s309 = scalar_lea.vmem %s2, %s308
        %s310 = smul.u32 16, %s28
        %v311 = vld [vmem:[%s269] sm:$0xff]
        %v312 = vld [vmem:[#allocation5] sm:$0xff]
        %v313 = vld [vmem:[#allocation5 + $0x8] sm:$0xff]
        %v314 = vld [vmem:[#allocation5 + $0x10] sm:$0xff]
        %v315 = vld [vmem:[#allocation5 + $0x18] sm:$0xff]
        %v316 = vld [vmem:[#allocation5 + $0x20] sm:$0xff]
        %v317 = vld [vmem:[#allocation5 + $0x28] sm:$0xff]
        %v318 = vld [vmem:[#allocation5 + $0x30] sm:$0xff]
        %v319 = vld [vmem:[#allocation5 + $0x38] sm:$0xff]
        %v320 = vld [vmem:[#allocation5 + $0x40] sm:$0xff]
        %v321 = vld [vmem:[#allocation5 + $0x48] sm:$0xff]
        %v322 = vld [vmem:[#allocation5 + $0x50] sm:$0xff]
        %v323 = vld [vmem:[#allocation5 + $0x58] sm:$0xff]
        %v324 = vld [vmem:[#allocation5 + $0x60] sm:$0xff]
        %v325 = vld [vmem:[#allocation5 + $0x68] sm:$0xff]
        %v326 = vld [vmem:[#allocation5 + $0x70] sm:$0xff]
        %v327 = vld [vmem:[#allocation5 + $0x78] sm:$0xff]
        %v328 = vld [vmem:[%s309] sm:$0x1]
        %v330 = vlaneseq
        %v331 = vshrl.u32 %v330, 7
        %v332 = vsub.s32 0, %v331
        %v333 = vrot.slane %v328, %v332
        %335 = vmatprep.subr.mxu0 0.0
        %336 = vmatpush1.msra.mxu0 %v312
        %337 = vmatprep.subr.mxu0 0.0
        %338 = vmatpush1.msra.mxu0 %v313
        %339 = vmatprep.subr.mxu0 0.0
        %340 = vmatpush1.msra.mxu0 %v314
        %341 = vmatprep.subr.mxu0 0.0
        %342 = vmatpush1.msra.mxu0 %v315
        %343 = vmatprep.subr.mxu0 0.0
        %344 = vmatpush1.msra.mxu0 %v316
        %345 = vmatprep.subr.mxu0 0.0
        %346 = vmatpush1.msra.mxu0 %v317
        %347 = vmatprep.subr.mxu0 0.0
        %348 = vmatpush1.msra.mxu0 %v318
        %349 = vmatprep.subr.mxu0 0.0
        %350 = vmatpush1.msra.mxu0 %v319
        %351 = vmatprep.subr.mxu0 0.0
        %352 = vmatpush1.msra.mxu0 %v320
        %353 = vmatprep.subr.mxu0 0.0
        %354 = vmatpush1.msra.mxu0 %v321
        %355 = vmatprep.subr.mxu0 0.0
        %356 = vmatpush1.msra.mxu0 %v322
        %357 = vmatprep.subr.mxu0 0.0
        %358 = vmatpush1.msra.mxu0 %v323
        %359 = vmatprep.subr.mxu0 0.0
        %360 = vmatpush1.msra.mxu0 %v324
        %361 = vmatprep.subr.mxu0 0.0
        %362 = vmatpush1.msra.mxu0 %v325
        %363 = vmatprep.subr.mxu0 0.0
        %364 = vmatpush1.msra.mxu0 %v326
        %365 = vmatprep.subr.mxu0 0.0
        %366 = vmatpush1.msra.mxu0 %v327
        %367 = vmatprep.subr.mxu0 0.0
        %368 = vmatpush1.msra.mxu0 0.0
        %369 = vmatprep.subr.mxu0 0.0
        %370 = vmatpush1.msra.mxu0 0.0
        %371 = vmatprep.subr.mxu0 0.0
        %372 = vmatpush1.msra.mxu0 0.0
        %373 = vmatprep.subr.mxu0 0.0
        %374 = vmatpush1.msra.mxu0 0.0
        %375 = vmatprep.subr.mxu0 0.0
        %376 = vmatpush1.msra.mxu0 0.0
        %377 = vmatprep.subr.mxu0 0.0
        %378 = vmatpush1.msra.mxu0 0.0
        %379 = vmatprep.subr.mxu0 0.0
        %380 = vmatpush1.msra.mxu0 0.0
        %381 = vmatprep.subr.mxu0 0.0
        %382 = vmatpush1.msra.mxu0 0.0
        %383 = vmatprep.subr.mxu0 0.0
        %384 = vmatpush1.msra.mxu0 0.0
        %385 = vmatprep.subr.mxu0 0.0
        %386 = vmatpush1.msra.mxu0 0.0
        %387 = vmatprep.subr.mxu0 0.0
        %388 = vmatpush1.msra.mxu0 0.0
        %389 = vmatprep.subr.mxu0 0.0
        %390 = vmatpush1.msra.mxu0 0.0
        %391 = vmatprep.subr.mxu0 0.0
        %392 = vmatpush1.msra.mxu0 0.0
        %393 = vmatprep.subr.mxu0 0.0
        %394 = vmatpush1.msra.mxu0 0.0
        %395 = vmatprep.subr.mxu0 0.0
        %396 = vmatpush1.msra.mxu0 0.0
        %397 = vmatprep.subr.mxu0 0.0
        %398 = vmatpush1.msra.mxu0 0.0
        %399 = vmatprep.mubr.f32.mxu0 0.0
        %400 = vmatmul.mubr.f32.gmra.mrb[0].mxu0 %v311
        %v401 = vpop.f32.mrb[0].mxu0
        %v402 = vadd.f32 %v333, %v401
        %v403 = vpop.f32.mrb[0].mxu0
        %404 = vdwg.mxu0
        %v405 = vmul.f32 %v402, 0.5
        %v406 = vmul.f32 %v402, 0.70710677
        %v407 = verf.f32.pop %v406
        %v408 = vadd.f32 %v407, 1.0
        %v409 = vmul.f32 %v405, %v408
        %v410 = vld [vmem:[#allocation7] sm:$0xff]
        %v411 = vld [vmem:[#allocation7 + $0x8] sm:$0xff]
        %v412 = vld [vmem:[#allocation7 + $0x10] sm:$0xff]
        %v413 = vld [vmem:[#allocation7 + $0x18] sm:$0xff]
        %v414 = vld [vmem:[#allocation7 + $0x20] sm:$0xff]
        %v415 = vld [vmem:[#allocation7 + $0x28] sm:$0xff]
        %v416 = vld [vmem:[#allocation7 + $0x30] sm:$0xff]
        %v417 = vld [vmem:[#allocation7 + $0x38] sm:$0xff]
        %v418 = vld [vmem:[#allocation7 + $0x40] sm:$0xff]
        %v419 = vld [vmem:[#allocation7 + $0x48] sm:$0xff]
        %v420 = vld [vmem:[#allocation7 + $0x50] sm:$0xff]
        %v421 = vld [vmem:[#allocation7 + $0x58] sm:$0xff]
        %v422 = vld [vmem:[#allocation7 + $0x60] sm:$0xff]
        %v423 = vld [vmem:[#allocation7 + $0x68] sm:$0xff]
        %v424 = vld [vmem:[#allocation7 + $0x70] sm:$0xff]
        %v425 = vld [vmem:[#allocation7 + $0x78] sm:$0xff]
        %v426 = vld [vmem:[%s4] sm:$0x1]
        %v428 = vlaneseq
        %v429 = vshrl.u32 %v428, 7
        %v430 = vsub.s32 0, %v429
        %v431 = vrot.slane %v426, %v430
        %433 = vmatprep.subr.mxu0 0.0
        %434 = vmatpush1.msra.mxu0 %v410
        %435 = vmatprep.subr.mxu0 0.0
        %436 = vmatpush1.msra.mxu0 %v411
        %437 = vmatprep.subr.mxu0 0.0
        %438 = vmatpush1.msra.mxu0 %v412
        %439 = vmatprep.subr.mxu0 0.0
        %440 = vmatpush1.msra.mxu0 %v413
        %441 = vmatprep.subr.mxu0 0.0
        %442 = vmatpush1.msra.mxu0 %v414
        %443 = vmatprep.subr.mxu0 0.0
        %444 = vmatpush1.msra.mxu0 %v415
        %445 = vmatprep.subr.mxu0 0.0
        %446 = vmatpush1.msra.mxu0 %v416
        %447 = vmatprep.subr.mxu0 0.0
        %448 = vmatpush1.msra.mxu0 %v417
        %449 = vmatprep.subr.mxu0 0.0
        %450 = vmatpush1.msra.mxu0 %v418
        %451 = vmatprep.subr.mxu0 0.0
        %452 = vmatpush1.msra.mxu0 %v419
        %453 = vmatprep.subr.mxu0 0.0
        %454 = vmatpush1.msra.mxu0 %v420
        %455 = vmatprep.subr.mxu0 0.0
        %456 = vmatpush1.msra.mxu0 %v421
        %457 = vmatprep.subr.mxu0 0.0
        %458 = vmatpush1.msra.mxu0 %v422
        %459 = vmatprep.subr.mxu0 0.0
        %460 = vmatpush1.msra.mxu0 %v423
        %461 = vmatprep.subr.mxu0 0.0
        %462 = vmatpush1.msra.mxu0 %v424
        %463 = vmatprep.subr.mxu0 0.0
        %464 = vmatpush1.msra.mxu0 %v425
        %465 = vmatprep.subr.mxu0 0.0
        %466 = vmatpush1.msra.mxu0 0.0
        %467 = vmatprep.subr.mxu0 0.0
        %468 = vmatpush1.msra.mxu0 0.0
        %469 = vmatprep.subr.mxu0 0.0
        %470 = vmatpush1.msra.mxu0 0.0
        %471 = vmatprep.subr.mxu0 0.0
        %472 = vmatpush1.msra.mxu0 0.0
        %473 = vmatprep.subr.mxu0 0.0
        %474 = vmatpush1.msra.mxu0 0.0
        %475 = vmatprep.subr.mxu0 0.0
        %476 = vmatpush1.msra.mxu0 0.0
        %477 = vmatprep.subr.mxu0 0.0
        %478 = vmatpush1.msra.mxu0 0.0
        %479 = vmatprep.subr.mxu0 0.0
        %480 = vmatpush1.msra.mxu0 0.0
        %481 = vmatprep.subr.mxu0 0.0
        %482 = vmatpush1.msra.mxu0 0.0
        %483 = vmatprep.subr.mxu0 0.0
        %484 = vmatpush1.msra.mxu0 0.0
        %485 = vmatprep.subr.mxu0 0.0
        %486 = vmatpush1.msra.mxu0 0.0
        %487 = vmatprep.subr.mxu0 0.0
        %488 = vmatpush1.msra.mxu0 0.0
        %489 = vmatprep.subr.mxu0 0.0
        %490 = vmatpush1.msra.mxu0 0.0
        %491 = vmatprep.subr.mxu0 0.0
        %492 = vmatpush1.msra.mxu0 0.0
        %493 = vmatprep.subr.mxu0 0.0
        %494 = vmatpush1.msra.mxu0 0.0
        %495 = vmatprep.subr.mxu0 0.0
        %496 = vmatpush1.msra.mxu0 0.0
        %497 = vmatprep.mubr.f32.mxu0 0.0
        %498 = vmatmul.mubr.f32.gmra.mrb[0].mxu0 %v409
        %v499 = vpop.f32.mrb[0].mxu0
        %v500 = vadd.f32 %v431, %v499
        %v501 = vpop.f32.mrb[0].mxu0
        %502 = vdwg.mxu0
        %503 = vst [vmem:[%s306] sm:$0xff] %v500
        %s504 = sand.u32 %s168, 1
        %s505 = scalar_lea.sflag [#allocation4], %s504
        %s506 = sand.u32 %s168, 1
        %s507 = smul.addr %s506, 8
        %s508 = scalar_lea.vmem [#allocation8], %s507
        // Predicated region
        $region53: #{tpu_custom_call.1} parent=39 // pred_check
          %p509 = pneg %p178
        $region54: #{tpu_custom_call.1} parent=39 // pred_check_branch
          %511 = sbr.rel (%p509) target = $region56
        $region55: #{tpu_custom_call.1} parent=39 // pred_region
          %s513 = ssub.s32 128, 128
          %514 = vsyncadd %s505, %s513
          %s515 = smul.addr %s27, 128
          %s516 = scalar_lea.hbm %s5, %s515
          %s518 = sshll.u32 %s508, 4
          %s519 = int_to_ptr.vmem [resolvable:$true] %s518
          %521 = dma.vmem_to_hbm [thread:$0]  %s519, 128, %s516, %s505
        $region56: #{tpu_custom_call.1} parent=39 // pred_fallthru
          _
      $region40: #{tpu_custom_call.1} parent=5 // pred_fallthru
        _
      %p522 = scmp.le.s32.totalorder 2, %s18
      // Predicated region
      $region57: #{tpu_custom_call.1} parent=5 // pred_check
        %p523 = pneg %p522
      $region58: #{tpu_custom_call.1} parent=5 // pred_check_branch
        %525 = sbr.rel (%p523) target = $region60
      $region59: #{tpu_custom_call.1} parent=5 // pred_region
        %s526 = ssub.s32 %s18, 2
        // Predicated region
        $region61: #{tpu_custom_call.1} parent=59 // pred_check
          %p527 = pneg %p184
        $region62: #{tpu_custom_call.1} parent=59 // pred_check_branch
          %529 = sbr.rel (%p527) target = $region64
        $region63: #{tpu_custom_call.1} parent=59 // pred_region
          %s530 = sand.u32 %s169, 1
          %s531 = scalar_lea.sflag [#allocation4], %s530
          %s532 = sand.u32 %s169, 1
          %s533 = smul.addr %s532, 8
          %s534 = scalar_lea.vmem [#allocation8], %s533
          %535 = dma.done %s531, 128
        $region64: #{tpu_custom_call.1} parent=59 // pred_fallthru
          _
      $region60: #{tpu_custom_call.1} parent=5 // pred_fallthru
        _
    $region6: #{tpu_custom_call.1} parent=1 // loop_footer
      %s22 = sadd.s32 1, %s18
    $region7: #{tpu_custom_call.1} parent=1 // loop_footer_branch
      %17 = sbr.rel target = $region3
    $region8: #{tpu_custom_call.1} parent=1 // loop_exit
      _
    %536 = vsyncpa [#allocation3], 1
    %s537 = scalar_lea.sflag [#allocation3], 1
    %538 = vsyncpa %s537, 1
    %539 = vsyncpa [#allocation6], 1
    %540 = vsyncpa [#allocation4], 1
    %s541 = scalar_lea.sflag [#allocation4], 1
    %542 = vsyncpa %s541, 1

</llo_original>
